<compile_context>
chip_gen: v7x
topology: tpu7x:2x2x1
jax: 0.10.0
libtpu: 0.0.40
codegen_flags: <defaults>
</compile_context>

<pallas_src>
import jax
import jax.numpy as jnp
from jax.experimental import pallas as pl
from jax.experimental.pallas import tpu as pltpu


# ---------------------------------------------------------------------------
# Helpers
# ---------------------------------------------------------------------------
def _round_up(x, m):
    return (x + m - 1) // m * m


def _pad2d(a, shape, dtype):
    """Zero-pad a 2-D array to `shape` and cast to `dtype` (no-op if already)."""
    dtype = jnp.dtype(dtype)
    if tuple(a.shape) == tuple(shape) and a.dtype == dtype:
        return a
    out = jnp.zeros(shape, dtype)
    return out.at[: a.shape[0], : a.shape[1]].set(a.astype(dtype))


def _tpu_vmem_and_gen():
    """(physical VMEM bytes per TensorCore, rough TPU generation)."""
    kind = ""
    try:
        kind = jax.devices()[0].device_kind.lower()
    except Exception:
        pass
    gen = 6
    for g in (7, 6, 5, 4):
        if f"v{g}" in kind:
            gen = g
            break
    vmem = 0
    try:
        vmem = int(pltpu.get_tpu_info().vmem_capacity_bytes)
    except Exception:
        vmem = 0
    if vmem <= 0:
        vmem = (64 if gen >= 7 else 128) * 1024 * 1024
    return vmem, gen


# ---------------------------------------------------------------------------
# Kernels
# ---------------------------------------------------------------------------
def _mlp_kernel_resident(x_ref, w1_ref, b1_ref, w2_ref, b2_ref, o_ref, h_ref):
    """2-D grid (batch tile i, out tile j); w1 fully resident in VMEM.

    x_ref:(bm,Cin_p)  w1_ref:(Cin_p,Cmid_p)  b1_ref:(1,Cmid_p) f32
    w2_ref:(Cmid_p,bn) b2_ref:(1,bn) f32     o_ref:(bm,bn)
    h_ref:(bm,Cmid_p) compute-dtype VMEM scratch, persists across j.
    """
    # Layer 1 (+bias+ReLU) once per batch tile, on the first out-column tile.
    @pl.when(pl.program_id(1) == 0)
    def _():
        h = jnp.dot(x_ref[...], w1_ref[...], preferred_element_type=jnp.float32)
        h_ref[...] = jnp.maximum(h + b1_ref[...], 0.0).astype(h_ref.dtype)

    # Layer 2 for this output-column tile (f32 MXU accumulation).
    y = jnp.dot(h_ref[...], w2_ref[...], preferred_element_type=jnp.float32)
    o_ref[...] = (y + b2_ref[...]).astype(o_ref.dtype)


def _mlp_kernel_kin_tiled(x_ref, w1_ref, b1_ref, w2_ref, b2_ref, o_ref,
                          acc_ref, h_ref):
    """3-D grid (batch tile i, out tile j, C_in tile k); w1 streamed over C_in.

    Used when a resident w1 would not fit the VMEM budget (big MLPs / v7x).
    acc_ref:(bm,Cmid_p) f32 layer-1 accumulator; h_ref: compute-dtype hidden.
    """
    j = pl.program_id(1)
    k = pl.program_id(2)
    nk = pl.num_programs(2)

    # Layer 1: accumulate x_k @ w1_k over C_in tiles (only for j == 0; the
    # index maps pin x / w1 to tile 0 for j > 0 so they are not re-streamed).
    @pl.when(j == 0)
    def _():
        @pl.when(k == 0)
        def _():
            acc_ref[...] = jnp.zeros_like(acc_ref)

        acc_ref[...] += jnp.dot(x_ref[...], w1_ref[...],
                                preferred_element_type=jnp.float32)

        @pl.when(k == nk - 1)
        def _():
            h_ref[...] = jnp.maximum(acc_ref[...] + b1_ref[...], 0.0
                                     ).astype(h_ref.dtype)

    # Layer 2: hidden activations are complete on the last C_in step.
    @pl.when(k == nk - 1)
    def _():
        y = jnp.dot(h_ref[...], w2_ref[...], preferred_element_type=jnp.float32)
        o_ref[...] = (y + b2_ref[...]).astype(o_ref.dtype)


# ---------------------------------------------------------------------------
# Parameter preparation (hoisted out of the per-call forward path)
# ---------------------------------------------------------------------------
def prepare_mlp_params(w1, b1, w2, b2, *, compute_dtype=jnp.bfloat16):
    """Pad the weights to lane-dense (multiple-of-128) shapes and cast once.

    Weights are laid out (fan_in, fan_out), i.e. the transpose of
    torch.nn.Linear.weight, so the kernel computes plain `x @ W + b`.
    Zero padding is mathematically inert: padded C_mid columns get bias 0,
    their ReLU output is 0 and contributes nothing to layer 2.
    """
    C_in, C_mid = w1.shape
    C_out = w2.shape[1]
    Cin_p, Cmid_p, Cout_p = (_round_up(c, 128) for c in (C_in, C_mid, C_out))
    cdtype = jnp.dtype(compute_dtype)
    return dict(
        w1=_pad2d(w1, (Cin_p, Cmid_p), cdtype),
        b1=_pad2d(b1.reshape(1, -1), (1, Cmid_p), jnp.float32),
        w2=_pad2d(w2, (Cmid_p, Cout_p), cdtype),
        b2=_pad2d(b2.reshape(1, -1), (1, Cout_p), jnp.float32),
        dims=(C_in, C_mid, C_out),
        compute_dtype=cdtype,
    )


# ---------------------------------------------------------------------------
# Forward
# ---------------------------------------------------------------------------
def mlp_forward(x, params, *, block_m=None, block_n=None, block_k=None,
                out_dtype=None):
    """relu(x @ w1 + b1) @ w2 + b2  (== the torch MLP module's forward)."""
    C_in, C_mid, C_out = params["dims"]
    cdtype = params["compute_dtype"]
    w1p, b1p, w2p, b2p = params["w1"], params["b1"], params["w2"], params["b2"]
    Cin_p, Cmid_p = w1p.shape
    Cout_p = w2p.shape[1]

    lead = x.shape[:-1]
    assert x.shape[-1] == C_in, f"expected last dim {C_in}, got {x.shape}"
    x2d = x.reshape(-1, C_in)
    B = x2d.shape[0]

    out_dtype = jnp.dtype(out_dtype) if out_dtype is not None else x.dtype
    isz = jnp.dtype(cdtype).itemsize
    osz = out_dtype.itemsize

    vmem_phys, gen = _tpu_vmem_and_gen()
    vmem_cap = int(vmem_phys * 0.82)            # leave Mosaic scratch headroom

    # ---- Tile selection ----------------------------------------------------
    if block_n is None:                         # lane-dense out tiles; 256 fills
        block_n = 256 if (Cout_p % 256 == 0) else 128   # the v6e/v7x MXU width
    block_n = min(block_n, Cout_p)
    assert block_n % 128 == 0 and Cout_p % block_n == 0

    auto_m = block_m is None
    if auto_m:
        target_m = 256 if gen <= 5 else 512     # big batch tiles amortize the
        if B >= target_m:                       # per-batch-tile w2 re-stream
            block_m = target_m
        elif B > 128:
            block_m = _round_up(B, 128)
        else:
            block_m = _round_up(max(B, 1), 8)
    assert block_m % 8 == 0

    k_divs = [128 * d for d in range(Cin_p // 128, 0, -1)
              if (Cin_p // 128) % d == 0]       # descending divisors of Cin_p
    auto_k = block_k is None
    if auto_k:
        block_k = Cin_p                         # w1 fully resident if possible
    assert block_k % 128 == 0 and Cin_p % block_k == 0

    def vmem_estimate(bm, bk):
        tiled = bk < Cin_p
        nbytes = (2 * bm * bk * isz                          # x tile (2 bufs)
                  + (2 if tiled else 1) * bk * Cmid_p * isz  # w1
                  + Cmid_p * 4                               # b1 (1 buf)
                  + 2 * Cmid_p * block_n * isz               # w2 tile
                  + 2 * block_n * 4                          # b2 tile
                  + 2 * bm * block_n * osz                   # out tile
                  + bm * Cmid_p * isz)                       # h scratch
        if tiled:
            nbytes += bm * Cmid_p * 4                        # f32 layer-1 acc
        return nbytes

    budget = int(0.85 * vmem_cap)
    while (auto_m or auto_k) and vmem_estimate(block_m, block_k) > budget:
        smaller_k = next((d for d in k_divs if d < block_k), None)
        if auto_k and smaller_k is not None and block_k > 512:
            block_k = smaller_k                 # tile w1 over C_in first
        elif auto_m and block_m > 128:
            block_m = _round_up(max(128, block_m // 2), 8)
        elif auto_k and smaller_k is not None:
            block_k = smaller_k
        else:
            break                               # nothing left to shrink

    Bp = _round_up(B, block_m)
    ni, nj, nk = Bp // block_m, Cout_p // block_n, Cin_p // block_k

    # ---- Pad the activations (weights were padded once in prepare_*) -------
    xp = _pad2d(x2d, (Bp, Cin_p), cdtype)

    # ---- Grid / specs -------------------------------------------------------
    single_buf = pl.Buffered(1)                 # constant-index inputs: 1 buffer
    if nk == 1:
        grid = (ni, nj)
        kernel = _mlp_kernel_resident
        in_specs = [
            pl.BlockSpec((block_m, Cin_p), lambda i, j: (i, 0)),
            pl.BlockSpec((Cin_p, Cmid_p), lambda i, j: (0, 0),
                         pipeline_mode=single_buf),
            pl.BlockSpec((1, Cmid_p), lambda i, j: (0, 0),
                         pipeline_mode=single_buf),
            pl.BlockSpec((Cmid_p, block_n), lambda i, j: (0, j)),
            pl.BlockSpec((1, block_n), lambda i, j: (0, j)),
        ]
        out_specs = pl.BlockSpec((block_m, block_n), lambda i, j: (i, j))
        scratch = [pltpu.VMEM((block_m, Cmid_p), cdtype)]
        dims = ("parallel", "arbitrary")
    else:
        # w1 does not fit resident: stream it over C_in on a reduction axis.
        # For j > 0 the index maps pin x / w1 to tile 0 so they are fetched
        # once per batch tile rather than once per output-column tile.
        grid = (ni, nj, nk)
        kernel = _mlp_kernel_kin_tiled
        in_specs = [
            pl.BlockSpec((block_m, block_k),
                         lambda i, j, k: (i, jnp.where(j == 0, k, 0))),
            pl.BlockSpec((block_k, Cmid_p),
                         lambda i, j, k: (jnp.where(j == 0, k, 0), 0)),
            pl.BlockSpec((1, Cmid_p), lambda i, j, k: (0, 0),
                         pipeline_mode=single_buf),
            pl.BlockSpec((Cmid_p, block_n), lambda i, j, k: (0, j)),
            pl.BlockSpec((1, block_n), lambda i, j, k: (0, j)),
        ]
        out_specs = pl.BlockSpec((block_m, block_n), lambda i, j, k: (i, j))
        scratch = [pltpu.VMEM((block_m, Cmid_p), jnp.float32),
                   pltpu.VMEM((block_m, Cmid_p), cdtype)]
        dims = ("parallel", "arbitrary", "arbitrary")

    vmem_limit = min(vmem_cap,
                     max(int(1.3 * vmem_estimate(block_m, block_k)),
                         32 * 1024 * 1024))

    flops = 2 * Bp * Cin_p * Cmid_p + 2 * Bp * Cmid_p * Cout_p
    w1_reads = 1 if nk == 1 else ni             # resident w1 is fetched once
    bytes_accessed = int(Bp * Cin_p * isz
                         + w1_reads * Cin_p * Cmid_p * isz
                         + ni * Cmid_p * Cout_p * isz      # w2 per batch tile
                         + Bp * Cout_p * osz
                         + (Cmid_p + Cout_p) * 4)

    out_p = pl.pallas_call(
        kernel,
        out_shape=jax.ShapeDtypeStruct((Bp, Cout_p), out_dtype),
        grid_spec=pltpu.PrefetchScalarGridSpec(
            num_scalar_prefetch=0,
            grid=grid,
            in_specs=in_specs,
            out_specs=out_specs,
            scratch_shapes=scratch,
        ),
        compiler_params=pltpu.CompilerParams(
            dimension_semantics=dims,
            vmem_limit_bytes=vmem_limit,
        ),
        cost_estimate=pl.CostEstimate(
            flops=flops, transcendentals=0, bytes_accessed=bytes_accessed),
    )(xp, w1p, b1p, w2p, b2p)

    return out_p[:B, :C_out].reshape(*lead, C_out)


# ---------------------------------------------------------------------------
# Reference / init (torch.nn.Linear default init, weights pre-transposed)
# ---------------------------------------------------------------------------
def init_mlp_params(key, in_channel, mid_channel, out_channel, dtype=jnp.float32):
    k1, k2, k3, k4 = jax.random.split(key, 4)
    bound1 = 1.0 / (in_channel ** 0.5)
    bound2 = 1.0 / (mid_channel ** 0.5)
    w1 = jax.random.uniform(k1, (in_channel, mid_channel), dtype, -bound1, bound1)
    b1 = jax.random.uniform(k2, (mid_channel,), dtype, -bound1, bound1)
    w2 = jax.random.uniform(k3, (mid_channel, out_channel), dtype, -bound2, bound2)
    b2 = jax.random.uniform(k4, (out_channel,), dtype, -bound2, bound2)
    return w1, b1, w2, b2


def _ref_mlp(x, w1, b1, w2, b2):
    h = jnp.maximum(jnp.dot(x, w1, precision="highest") + b1, 0.0)
    return jnp.dot(h, w2, precision="highest") + b2


if __name__ == "__main__":
    key = jax.random.PRNGKey(0)
    kx, kp, kx2, kp2 = jax.random.split(key, 4)

    # --- Small single-tile shapes consistent with the module ----------------
    batch, in_ch, mid_ch, out_ch = 8, 32, 64, 16
    x = jax.random.normal(kx, (batch, in_ch), jnp.float32)
    w1, b1, w2, b2 = init_mlp_params(kp, in_ch, mid_ch, out_ch)
    ref = _ref_mlp(x, w1, b1, w2, b2)

    # f32 compute path.
    params_f32 = prepare_mlp_params(w1, b1, w2, b2, compute_dtype=jnp.float32)
    out = jax.block_until_ready(mlp_forward(x, params_f32))
    assert out.shape == (batch, out_ch)
    assert jnp.allclose(out, ref, atol=5e-3, rtol=5e-3)

    # Default bf16 compute path (f32 accumulation) — looser tolerance.
    params_bf16 = prepare_mlp_params(w1, b1, w2, b2)
    out_bf16 = jax.block_until_ready(mlp_forward(x, params_bf16))
    assert out_bf16.shape == (batch, out_ch)
    assert jnp.allclose(out_bf16, ref, atol=5e-2, rtol=5e-2)

    # --- Multi-tile paths: batch / C_out tiling, padding, w1 C_in tiling ----
    B2, Ci2, Cm2, Co2 = 160, 200, 300, 144
    x2 = jax.random.normal(kx2, (B2, Ci2), jnp.float32)
    w1b, b1b, w2b, b2b = init_mlp_params(kp2, Ci2, Cm2, Co2)
    ref2 = _ref_mlp(x2, w1b, b1b, w2b, b2b)
    params2 = prepare_mlp_params(w1b, b1b, w2b, b2b, compute_dtype=jnp.float32)

    # (a) 2-D grid with resident w1 (several batch & out-column tiles).
    out2a = jax.block_until_ready(
        mlp_forward(x2, params2, block_m=64, block_n=128))
    assert out2a.shape == (B2, Co2)
    assert jnp.allclose(out2a, ref2, atol=5e-3, rtol=5e-3)

    # (b) 3-D grid with w1 tiled over C_in (large-w1 / v7x fallback path).
    out2b = jax.block_until_ready(
        mlp_forward(x2, params2, block_m=64, block_n=128, block_k=128))
    assert out2b.shape == (B2, Co2)
    assert jnp.allclose(out2b, ref2, atol=5e-3, rtol=5e-3)

    print("KERNEL_OK")
</pallas_src>

<mosaic_0001>
module attributes {stable_mosaic.version = 11 : i64} {
  func.func @_mlp_kernel_resident(%arg0: i32, %arg1: i32, %arg2: memref<8x128xf32, #tpu.memory_space<vmem>>, %arg3: memref<128x128xf32, #tpu.memory_space<vmem>>, %arg4: memref<1x128xf32, #tpu.memory_space<vmem>>, %arg5: memref<128x128xf32, #tpu.memory_space<vmem>>, %arg6: memref<1x128xf32, #tpu.memory_space<vmem>>, %arg7: memref<8x128xf32, #tpu.memory_space<vmem>>, %arg8: memref<8x128xf32, #tpu.memory_space<vmem>>) attributes {dimension_semantics = [#tpu.dimension_semantics<parallel>, #tpu.dimension_semantics<arbitrary>], iteration_bounds = array<i64: 1, 1>, scalar_prefetch = 0 : i64, scratch_operands = 1 : i64, tpu.core_type = #tpu.core_type<tc>, window_params = [{transform_indices = @transform_0, window_bounds = array<i64: 8, 128>}, {pipeline_mode = #tpu.pipeline_mode<synchronous>, transform_indices = @transform_1, window_bounds = array<i64: 128, 128>}, {pipeline_mode = #tpu.pipeline_mode<synchronous>, transform_indices = @transform_2, window_bounds = array<i64: 1, 128>}, {transform_indices = @transform_3, window_bounds = array<i64: 128, 128>}, {transform_indices = @transform_4, window_bounds = array<i64: 1, 128>}, {transform_indices = @transform_5, window_bounds = array<i64: 8, 128>}]} {
    %c0_i32 = arith.constant 0 : i32
    %0 = arith.cmpi eq, %arg1, %c0_i32 : i32
    %1 = arith.extui %0 : i1 to i32
    %c0_i32_0 = arith.constant 0 : i32
    %2 = arith.cmpi ne, %1, %c0_i32_0 : i32
    scf.if %2 {
      %c0_8 = arith.constant 0 : index
      %c0_9 = arith.constant 0 : index
      %10 = vector.load %arg2[%c0_8, %c0_9] : memref<8x128xf32, #tpu.memory_space<vmem>>, vector<8x128xf32>
      %c0_10 = arith.constant 0 : index
      %c0_11 = arith.constant 0 : index
      %11 = vector.load %arg3[%c0_10, %c0_11] : memref<128x128xf32, #tpu.memory_space<vmem>>, vector<128x128xf32>
      %cst_12 = arith.constant dense<0.000000e+00> : vector<8x128xf32>
      %12 = tpu.matmul %10, %11, %cst_12 {dimension_numbers = #tpu.dot_dimension_numbers<[1], [0], [0], [1], [0, 0, 1, 1], [], []>} : vector<8x128xf32>, vector<128x128xf32>, vector<8x128xf32> -> vector<8x128xf32>
      %c0_13 = arith.constant 0 : index
      %c0_14 = arith.constant 0 : index
      %13 = vector.load %arg4[%c0_13, %c0_14] : memref<1x128xf32, #tpu.memory_space<vmem>>, vector<1x128xf32>
      %14 = vector.broadcast %13 : vector<1x128xf32> to vector<8x128xf32>
      %15 = arith.addf %12, %14 : vector<8x128xf32>
      %cst_15 = arith.constant 0.000000e+00 : f32
      %16 = vector.broadcast %cst_15 : f32 to vector<8x128xf32>
      %17 = arith.maximumf %15, %16 : vector<8x128xf32>
      %c0_16 = arith.constant 0 : index
      %c0_17 = arith.constant 0 : index
      %18 = vector.load %arg8[%c0_16, %c0_17] : memref<8x128xf32, #tpu.memory_space<vmem>>, vector<8x128xf32>
      tpu.vector_store %arg8[%c0_16, %c0_17], %17 {strides = array<i32>} : memref<8x128xf32, #tpu.memory_space<vmem>>, vector<8x128xf32>,
    } else {
    }
    %c0 = arith.constant 0 : index
    %c0_1 = arith.constant 0 : index
    %3 = vector.load %arg8[%c0, %c0_1] : memref<8x128xf32, #tpu.memory_space<vmem>>, vector<8x128xf32>
    %c0_2 = arith.constant 0 : index
    %c0_3 = arith.constant 0 : index
    %4 = vector.load %arg5[%c0_2, %c0_3] : memref<128x128xf32, #tpu.memory_space<vmem>>, vector<128x128xf32>
    %cst = arith.constant dense<0.000000e+00> : vector<8x128xf32>
    %5 = tpu.matmul %3, %4, %cst {dimension_numbers = #tpu.dot_dimension_numbers<[1], [0], [0], [1], [0, 0, 1, 1], [], []>} : vector<8x128xf32>, vector<128x128xf32>, vector<8x128xf32> -> vector<8x128xf32>
    %c0_4 = arith.constant 0 : index
    %c0_5 = arith.constant 0 : index
    %6 = vector.load %arg6[%c0_4, %c0_5] : memref<1x128xf32, #tpu.memory_space<vmem>>, vector<1x128xf32>
    %7 = vector.broadcast %6 : vector<1x128xf32> to vector<8x128xf32>
    %8 = arith.addf %5, %7 : vector<8x128xf32>
    %c0_6 = arith.constant 0 : index
    %c0_7 = arith.constant 0 : index
    %9 = vector.load %arg7[%c0_6, %c0_7] : memref<8x128xf32, #tpu.memory_space<vmem>>, vector<8x128xf32>
    tpu.vector_store %arg7[%c0_6, %c0_7], %8 {strides = array<i32>} : memref<8x128xf32, #tpu.memory_space<vmem>>, vector<8x128xf32>,
    return
  }
  func.func @transform_0(%arg0: i32, %arg1: i32) -> (i32, i32) {
    %c0_i32 = arith.constant 0 : i32
    %c0_i32_0 = arith.constant 0 : i32
    return %arg0, %c0_i32 : i32, i32
  }
  func.func @transform_1(%arg0: i32, %arg1: i32) -> (i32, i32) {
    %c0_i32 = arith.constant 0 : i32
    %c0_i32_0 = arith.constant 0 : i32
    %c0_i32_1 = arith.constant 0 : i32
    return %c0_i32, %c0_i32_0 : i32, i32
  }
  func.func @transform_2(%arg0: i32, %arg1: i32) -> (i32, i32) {
    %c0_i32 = arith.constant 0 : i32
    %c0_i32_0 = arith.constant 0 : i32
    %c0_i32_1 = arith.constant 0 : i32
    return %c0_i32, %c0_i32_0 : i32, i32
  }
  func.func @transform_3(%arg0: i32, %arg1: i32) -> (i32, i32) {
    %c0_i32 = arith.constant 0 : i32
    %c0_i32_0 = arith.constant 0 : i32
    return %c0_i32, %arg1 : i32, i32
  }
  func.func @transform_4(%arg0: i32, %arg1: i32) -> (i32, i32) {
    %c0_i32 = arith.constant 0 : i32
    %c0_i32_0 = arith.constant 0 : i32
    return %c0_i32, %arg1 : i32, i32
  }
  func.func @transform_5(%arg0: i32, %arg1: i32) -> (i32, i32) {
    %c0_i32 = arith.constant 0 : i32
    return %arg0, %arg1 : i32, i32
  }
}

</mosaic_0001>

<llo_original>
// kernel: tpu_custom_call.1
$region0: #{tpu_custom_call.1}
  #allocation0 [shape = 'u32[]', space=smem, size = 0x4, offset = 0x4, fixed_abs, tag = 'smem constant byte address 0x4 - core index']
  #allocation1 [shape = 'u32[144,128]{1,0:T(1,128)}', space=vmem, size = 0x12000, scoped, tag = 'internal scratch']
  #allocation2 [shape = 'f32[8,128]{1,0:T(8,128)}', space=vmem, size = 0x1000, scoped, tag = 'scratch operand']
  %s0 = inlined_call_operand.hbm [shape: f32[8,128], index: 0, kind: input, shape index: {}]
  %s1 = inlined_call_operand.hbm [shape: f32[128,128], index: 1, kind: input, shape index: {}]
  %s2 = inlined_call_operand.vmem [shape: f32[1,128], index: 2, kind: input, shape index: {}]
  %s3 = inlined_call_operand.hbm [shape: f32[128,128], index: 3, kind: input, shape index: {}]
  %s4 = inlined_call_operand.vmem [shape: f32[1,128], index: 4, kind: input, shape index: {}]
  %s5 = inlined_call_operand.hbm [shape: f32[8,128], index: 5, kind: output, shape index: {}]
  %s6 = sld [smem:[#allocation0]]
  $region46: #{tpu_custom_call.1} parent=0
    _
  %s8 = ssub.s32 1, %s6
  %s9 = scalar_select 0, %s8, %s6
  $region1: #{tpu_custom_call.1} parent=0
    #allocation3 [shape = 'u8[4096]{0}', space=vmem, size = 0x1000, scoped, tag = 'input window, operand 0, single buffered']
    #allocation4 [shape = 's32[1]{0}', space=sflag, size = 0x4, scoped, tag = 'scoped memory for tpu_custom_call.1']
    #allocation5 [shape = 's32[1]{0}', space=sflag, size = 0x4, scoped, tag = 'scoped memory for tpu_custom_call.1']
    #allocation6 [shape = 'u8[65536]{0}', space=vmem, size = 0x10000, scoped, tag = 'input window, operand 1, single buffered']
    #allocation7 [shape = 's32[1]{0}', space=sflag, size = 0x4, scoped, tag = 'scoped memory for tpu_custom_call.1']
    #allocation8 [shape = 'u8[65536]{0}', space=vmem, size = 0x10000, scoped, tag = 'input window, operand 3, single buffered']
    #allocation9 [shape = 'u8[4096]{0}', space=vmem, size = 0x1000, scoped, tag = 'output window, operand 0, single buffered']
    %10 = vsyncpa [#allocation4], 0
    %11 = vsyncpa [#allocation7], 0
    %12 = vsyncpa [#allocation5], 0
    // Predicated region
    $region2: #{tpu_custom_call.1} parent=1 // pred_check
      _
    $region3: #{tpu_custom_call.1} parent=1 // pred_check_branch
      %14 = sbr.rel (0) target = $region5
    $region4: #{tpu_custom_call.1} parent=1 // pred_region
      %s16 = ssub.s32 128, 128
      %17 = vsyncadd [#allocation4], %s16
      %s19 = sshll.u32 [#allocation3], 4
      %s20 = int_to_ptr.vmem [resolvable:$true] %s19
      %22 = dma.hbm_to_vmem [thread:$0]  %s0, 128, %s20, [#allocation4]
    $region5: #{tpu_custom_call.1} parent=1 // pred_fallthru
      _
    // Predicated region
    $region6: #{tpu_custom_call.1} parent=1 // pred_check
      _
    $region7: #{tpu_custom_call.1} parent=1 // pred_check_branch
      %24 = sbr.rel (0) target = $region9
    $region8: #{tpu_custom_call.1} parent=1 // pred_region
      %s26 = ssub.s32 2048, 2048
      %27 = vsyncadd [#allocation7], %s26
      %s28 = sshll.u32 [#allocation6], 4
      %s29 = int_to_ptr.vmem [resolvable:$true] %s28
      %34 = dma.hbm_to_vmem [thread:$0]  %s1, 2048, %s29, [#allocation7], 128, 128, 8
    $region9: #{tpu_custom_call.1} parent=1 // pred_fallthru
      _
    // Predicated region
    $region10: #{tpu_custom_call.1} parent=1 // pred_check
      _
    $region11: #{tpu_custom_call.1} parent=1 // pred_check_branch
      %36 = sbr.rel (0) target = $region13
    $region12: #{tpu_custom_call.1} parent=1 // pred_region
      _
    $region13: #{tpu_custom_call.1} parent=1 // pred_fallthru
      _
    // Predicated region
    $region14: #{tpu_custom_call.1} parent=1 // pred_check
      _
    $region15: #{tpu_custom_call.1} parent=1 // pred_check_branch
      %38 = sbr.rel (0) target = $region17
    $region16: #{tpu_custom_call.1} parent=1 // pred_region
      %s40 = ssub.s32 2048, 2048
      %41 = vsyncadd [#allocation7], %s40
      %s42 = sshll.u32 [#allocation8], 4
      %s43 = int_to_ptr.vmem [resolvable:$true] %s42
      %48 = dma.hbm_to_vmem [thread:$0]  %s3, 2048, %s43, [#allocation7], 128, 128, 8
    $region17: #{tpu_custom_call.1} parent=1 // pred_fallthru
      _
    // Predicated region
    $region18: #{tpu_custom_call.1} parent=1 // pred_check
      _
    $region19: #{tpu_custom_call.1} parent=1 // pred_check_branch
      %50 = sbr.rel (0) target = $region21
    $region20: #{tpu_custom_call.1} parent=1 // pred_region
      _
    $region21: #{tpu_custom_call.1} parent=1 // pred_fallthru
      _
    // Predicated region
    $region22: #{tpu_custom_call.1} parent=1 // pred_check
      _
    $region23: #{tpu_custom_call.1} parent=1 // pred_check_branch
      %52 = sbr.rel (0) target = $region25
    $region24: #{tpu_custom_call.1} parent=1 // pred_region
      %53 = dma.done [#allocation4], 128
    $region25: #{tpu_custom_call.1} parent=1 // pred_fallthru
      _
    // Predicated region
    $region26: #{tpu_custom_call.1} parent=1 // pred_check
      _
    $region27: #{tpu_custom_call.1} parent=1 // pred_check_branch
      %55 = sbr.rel (0) target = $region29
    $region28: #{tpu_custom_call.1} parent=1 // pred_region
      %56 = dma.done [#allocation7], 2048
    $region29: #{tpu_custom_call.1} parent=1 // pred_fallthru
      _
    // Predicated region
    $region30: #{tpu_custom_call.1} parent=1 // pred_check
      _
    $region31: #{tpu_custom_call.1} parent=1 // pred_check_branch
      %58 = sbr.rel (0) target = $region33
    $region32: #{tpu_custom_call.1} parent=1 // pred_region
      %59 = dma.done [#allocation7], 2048
    $region33: #{tpu_custom_call.1} parent=1 // pred_fallthru
      _
    %p60 = scmp.eq.s32.totalorder 0, 0
    // Predicated region
    $region34: #{tpu_custom_call.1} parent=1 // pred_check
      %p61 = pneg %p60
    $region35: #{tpu_custom_call.1} parent=1 // pred_check_branch
      %63 = sbr.rel (%p61) target = $region37
    $region36: #{tpu_custom_call.1} parent=1 // pred_region
      %v64 = vld [vmem:[#allocation3] sm:$0xff]
      %v65 = vld [vmem:[#allocation6] sm:$0xff]
      %v66 = vld [vmem:[#allocation6 + $0x8] sm:$0xff]
      %v67 = vld [vmem:[#allocation6 + $0x10] sm:$0xff]
      %v68 = vld [vmem:[#allocation6 + $0x18] sm:$0xff]
      %v69 = vld [vmem:[#allocation6 + $0x20] sm:$0xff]
      %v70 = vld [vmem:[#allocation6 + $0x28] sm:$0xff]
      %v71 = vld [vmem:[#allocation6 + $0x30] sm:$0xff]
      %v72 = vld [vmem:[#allocation6 + $0x38] sm:$0xff]
      %v73 = vld [vmem:[#allocation6 + $0x40] sm:$0xff]
      %v74 = vld [vmem:[#allocation6 + $0x48] sm:$0xff]
      %v75 = vld [vmem:[#allocation6 + $0x50] sm:$0xff]
      %v76 = vld [vmem:[#allocation6 + $0x58] sm:$0xff]
      %v77 = vld [vmem:[#allocation6 + $0x60] sm:$0xff]
      %v78 = vld [vmem:[#allocation6 + $0x68] sm:$0xff]
      %v79 = vld [vmem:[#allocation6 + $0x70] sm:$0xff]
      %v80 = vld [vmem:[#allocation6 + $0x78] sm:$0xff]
      %v81 = vld [vmem:[%s2] sm:$0x1]
      %v83 = vlaneseq
      %v84 = vshrl.u32 %v83, 7
      %v85 = vsub.s32 0, %v84
      %v86 = vrot.slane %v81, %v85
      %88 = vmatprep.subr.mxu0 0.0
      %89 = vmatpush1.msra.mxu0 %v65
      %90 = vmatprep.subr.mxu0 0.0
      %91 = vmatpush1.msra.mxu0 %v66
      %92 = vmatprep.subr.mxu0 0.0
      %93 = vmatpush1.msra.mxu0 %v67
      %94 = vmatprep.subr.mxu0 0.0
      %95 = vmatpush1.msra.mxu0 %v68
      %96 = vmatprep.subr.mxu0 0.0
      %97 = vmatpush1.msra.mxu0 %v69
      %98 = vmatprep.subr.mxu0 0.0
      %99 = vmatpush1.msra.mxu0 %v70
      %100 = vmatprep.subr.mxu0 0.0
      %101 = vmatpush1.msra.mxu0 %v71
      %102 = vmatprep.subr.mxu0 0.0
      %103 = vmatpush1.msra.mxu0 %v72
      %104 = vmatprep.subr.mxu0 0.0
      %105 = vmatpush1.msra.mxu0 %v73
      %106 = vmatprep.subr.mxu0 0.0
      %107 = vmatpush1.msra.mxu0 %v74
      %108 = vmatprep.subr.mxu0 0.0
      %109 = vmatpush1.msra.mxu0 %v75
      %110 = vmatprep.subr.mxu0 0.0
      %111 = vmatpush1.msra.mxu0 %v76
      %112 = vmatprep.subr.mxu0 0.0
      %113 = vmatpush1.msra.mxu0 %v77
      %114 = vmatprep.subr.mxu0 0.0
      %115 = vmatpush1.msra.mxu0 %v78
      %116 = vmatprep.subr.mxu0 0.0
      %117 = vmatpush1.msra.mxu0 %v79
      %118 = vmatprep.subr.mxu0 0.0
      %119 = vmatpush1.msra.mxu0 %v80
      %120 = vmatprep.subr.mxu0 0.0
      %121 = vmatpush1.msra.mxu0 0.0
      %122 = vmatprep.subr.mxu0 0.0
      %123 = vmatpush1.msra.mxu0 0.0
      %124 = vmatprep.subr.mxu0 0.0
      %125 = vmatpush1.msra.mxu0 0.0
      %126 = vmatprep.subr.mxu0 0.0
      %127 = vmatpush1.msra.mxu0 0.0
      %128 = vmatprep.subr.mxu0 0.0
      %129 = vmatpush1.msra.mxu0 0.0
      %130 = vmatprep.subr.mxu0 0.0
      %131 = vmatpush1.msra.mxu0 0.0
      %132 = vmatprep.subr.mxu0 0.0
      %133 = vmatpush1.msra.mxu0 0.0
      %134 = vmatprep.subr.mxu0 0.0
      %135 = vmatpush1.msra.mxu0 0.0
      %136 = vmatprep.subr.mxu0 0.0
      %137 = vmatpush1.msra.mxu0 0.0
      %138 = vmatprep.subr.mxu0 0.0
      %139 = vmatpush1.msra.mxu0 0.0
      %140 = vmatprep.subr.mxu0 0.0
      %141 = vmatpush1.msra.mxu0 0.0
      %142 = vmatprep.subr.mxu0 0.0
      %143 = vmatpush1.msra.mxu0 0.0
      %144 = vmatprep.subr.mxu0 0.0
      %145 = vmatpush1.msra.mxu0 0.0
      %146 = vmatprep.subr.mxu0 0.0
      %147 = vmatpush1.msra.mxu0 0.0
      %148 = vmatprep.subr.mxu0 0.0
      %149 = vmatpush1.msra.mxu0 0.0
      %150 = vmatprep.subr.mxu0 0.0
      %151 = vmatpush1.msra.mxu0 0.0
      %152 = vmatprep.mubr.f32.mxu0 0.0
      %153 = vmatmul.mubr.f32.gmra.mrb[0].mxu0 %v64
      %v154 = vpop.f32.mrb[0].mxu0
      %v155 = vadd.f32 %v86, %v154
      %v156 = vpop.f32.mrb[0].mxu0
      %157 = vdwg.mxu0
      %v158 = vmax.f32 %v155, 0.0
      %159 = vst [vmem:[#allocation2] sm:$0xff] %v158
    $region37: #{tpu_custom_call.1} parent=1 // pred_fallthru
      _
    %v160 = vld [vmem:[#allocation2] sm:$0xff]
    %v161 = vld [vmem:[#allocation8] sm:$0xff]
    %v162 = vld [vmem:[#allocation8 + $0x8] sm:$0xff]
    %v163 = vld [vmem:[#allocation8 + $0x10] sm:$0xff]
    %v164 = vld [vmem:[#allocation8 + $0x18] sm:$0xff]
    %v165 = vld [vmem:[#allocation8 + $0x20] sm:$0xff]
    %v166 = vld [vmem:[#allocation8 + $0x28] sm:$0xff]
    %v167 = vld [vmem:[#allocation8 + $0x30] sm:$0xff]
    %v168 = vld [vmem:[#allocation8 + $0x38] sm:$0xff]
    %v169 = vld [vmem:[#allocation8 + $0x40] sm:$0xff]
    %v170 = vld [vmem:[#allocation8 + $0x48] sm:$0xff]
    %v171 = vld [vmem:[#allocation8 + $0x50] sm:$0xff]
    %v172 = vld [vmem:[#allocation8 + $0x58] sm:$0xff]
    %v173 = vld [vmem:[#allocation8 + $0x60] sm:$0xff]
    %v174 = vld [vmem:[#allocation8 + $0x68] sm:$0xff]
    %v175 = vld [vmem:[#allocation8 + $0x70] sm:$0xff]
    %v176 = vld [vmem:[#allocation8 + $0x78] sm:$0xff]
    %v177 = vld [vmem:[%s4] sm:$0x1]
    %v179 = vlaneseq
    %v180 = vshrl.u32 %v179, 7
    %v181 = vsub.s32 0, %v180
    %v182 = vrot.slane %v177, %v181
    %184 = vmatprep.subr.mxu0 0.0
    %185 = vmatpush1.msra.mxu0 %v161
    %186 = vmatprep.subr.mxu0 0.0
    %187 = vmatpush1.msra.mxu0 %v162
    %188 = vmatprep.subr.mxu0 0.0
    %189 = vmatpush1.msra.mxu0 %v163
    %190 = vmatprep.subr.mxu0 0.0
    %191 = vmatpush1.msra.mxu0 %v164
    %192 = vmatprep.subr.mxu0 0.0
    %193 = vmatpush1.msra.mxu0 %v165
    %194 = vmatprep.subr.mxu0 0.0
    %195 = vmatpush1.msra.mxu0 %v166
    %196 = vmatprep.subr.mxu0 0.0
    %197 = vmatpush1.msra.mxu0 %v167
    %198 = vmatprep.subr.mxu0 0.0
    %199 = vmatpush1.msra.mxu0 %v168
    %200 = vmatprep.subr.mxu0 0.0
    %201 = vmatpush1.msra.mxu0 %v169
    %202 = vmatprep.subr.mxu0 0.0
    %203 = vmatpush1.msra.mxu0 %v170
    %204 = vmatprep.subr.mxu0 0.0
    %205 = vmatpush1.msra.mxu0 %v171
    %206 = vmatprep.subr.mxu0 0.0
    %207 = vmatpush1.msra.mxu0 %v172
    %208 = vmatprep.subr.mxu0 0.0
    %209 = vmatpush1.msra.mxu0 %v173
    %210 = vmatprep.subr.mxu0 0.0
    %211 = vmatpush1.msra.mxu0 %v174
    %212 = vmatprep.subr.mxu0 0.0
    %213 = vmatpush1.msra.mxu0 %v175
    %214 = vmatprep.subr.mxu0 0.0
    %215 = vmatpush1.msra.mxu0 %v176
    %216 = vmatprep.subr.mxu0 0.0
    %217 = vmatpush1.msra.mxu0 0.0
    %218 = vmatprep.subr.mxu0 0.0
    %219 = vmatpush1.msra.mxu0 0.0
    %220 = vmatprep.subr.mxu0 0.0
    %221 = vmatpush1.msra.mxu0 0.0
    %222 = vmatprep.subr.mxu0 0.0
    %223 = vmatpush1.msra.mxu0 0.0
    %224 = vmatprep.subr.mxu0 0.0
    %225 = vmatpush1.msra.mxu0 0.0
    %226 = vmatprep.subr.mxu0 0.0
    %227 = vmatpush1.msra.mxu0 0.0
    %228 = vmatprep.subr.mxu0 0.0
    %229 = vmatpush1.msra.mxu0 0.0
    %230 = vmatprep.subr.mxu0 0.0
    %231 = vmatpush1.msra.mxu0 0.0
    %232 = vmatprep.subr.mxu0 0.0
    %233 = vmatpush1.msra.mxu0 0.0
    %234 = vmatprep.subr.mxu0 0.0
    %235 = vmatpush1.msra.mxu0 0.0
    %236 = vmatprep.subr.mxu0 0.0
    %237 = vmatpush1.msra.mxu0 0.0
    %238 = vmatprep.subr.mxu0 0.0
    %239 = vmatpush1.msra.mxu0 0.0
    %240 = vmatprep.subr.mxu0 0.0
    %241 = vmatpush1.msra.mxu0 0.0
    %242 = vmatprep.subr.mxu0 0.0
    %243 = vmatpush1.msra.mxu0 0.0
    %244 = vmatprep.subr.mxu0 0.0
    %245 = vmatpush1.msra.mxu0 0.0
    %246 = vmatprep.subr.mxu0 0.0
    %247 = vmatpush1.msra.mxu0 0.0
    %248 = vmatprep.mubr.f32.mxu0 0.0
    %249 = vmatmul.mubr.f32.gmra.mrb[0].mxu0 %v160
    %v250 = vpop.f32.mrb[0].mxu0
    %v251 = vadd.f32 %v182, %v250
    %v252 = vpop.f32.mrb[0].mxu0
    %253 = vdwg.mxu0
    %254 = vst [vmem:[#allocation9] sm:$0xff] %v251
    // Predicated region
    $region38: #{tpu_custom_call.1} parent=1 // pred_check
      _
    $region39: #{tpu_custom_call.1} parent=1 // pred_check_branch
      %256 = sbr.rel (0) target = $region41
    $region40: #{tpu_custom_call.1} parent=1 // pred_region
      %s258 = ssub.s32 128, 128
      %259 = vsyncadd [#allocation5], %s258
      %s261 = sshll.u32 [#allocation9], 4
      %s262 = int_to_ptr.vmem [resolvable:$true] %s261
      %264 = dma.vmem_to_hbm [thread:$0]  %s262, 128, %s5, [#allocation5]
    $region41: #{tpu_custom_call.1} parent=1 // pred_fallthru
      _
    // Predicated region
    $region42: #{tpu_custom_call.1} parent=1 // pred_check
      _
    $region43: #{tpu_custom_call.1} parent=1 // pred_check_branch
      %266 = sbr.rel (0) target = $region45
    $region44: #{tpu_custom_call.1} parent=1 // pred_region
      %267 = dma.done [#allocation5], 128
    $region45: #{tpu_custom_call.1} parent=1 // pred_fallthru
      _
    %268 = vsyncpa [#allocation4], 1
    %269 = vsyncpa [#allocation7], 1
    %270 = vsyncpa [#allocation5], 1

</llo_original>
